<compile_context>
chip_gen: v6e
topology: v6e:2x2x1
jax: 0.10.0
libtpu: 0.0.40
codegen_flags: <defaults>
</compile_context>

<pallas_src>
import numpy as np
import jax
import jax.numpy as jnp
from jax.experimental import pallas as pl
from jax.experimental.pallas import tpu as pltpu


_TILE_VMEM_BUDGET = 40 * 1024 * 1024   # bytes used when sizing blocks
_VMEM_LIMIT = 48 * 1024 * 1024          # scoped VMEM limit (safe on 64 MiB v7x)


def _cdiv(a, b):
    return -(-a // b)


# ----------------------------------------------------------------------------
# Glue: linear operators for adaptive avg-pool and bilinear upsample
# ----------------------------------------------------------------------------
def _adaptive_pool_matrix(out_size, in_size):
    """P[i, r] = 1/len(bin_i) for r in bin_i (PyTorch AdaptiveAvgPool2d bins)."""
    P = np.zeros((out_size, in_size), dtype=np.float32)
    for i in range(out_size):
        start = (i * in_size) // out_size
        end = -(-((i + 1) * in_size) // out_size)  # ceil
        P[i, start:end] = 1.0 / (end - start)
    return P


def _bilinear_matrix(out_size, in_size):
    """A[o, i]: bilinear weights, PyTorch align_corners=False convention."""
    A = np.zeros((out_size, in_size), dtype=np.float32)
    scale = in_size / out_size
    for o in range(out_size):
        src = max((o + 0.5) * scale - 0.5, 0.0)
        i0 = min(int(np.floor(src)), in_size - 1)
        i1 = min(i0 + 1, in_size - 1)
        lam = src - i0
        A[o, i0] += 1.0 - lam
        A[o, i1] += lam
    return A


# ----------------------------------------------------------------------------
# Block-size selection (VMEM-budget driven, robust to any N/Cin/HW)
# ----------------------------------------------------------------------------
def _pick_channel_tile(c_in, hw, lane_w, budget_bytes=_TILE_VMEM_BUDGET):
    """Stage-1 tile along Cin: full dim if small, else a mult-of-8 tile that
    keeps (x tile + pooled tile) x2 + kpool x2 under the budget."""
    bytes_per = 4
    fixed = 2 * hw * lane_w * bytes_per               # kpool, double-buffered
    per_row = 2 * bytes_per * (hw + lane_w)           # x row + pooled row, x2
    avail = max(budget_bytes - fixed, per_row * 8)
    tc = min(avail // per_row, 1024, c_in)
    if tc >= c_in:
        return c_in                                   # full dim is always legal
    return max((tc // 8) * 8, 8)


def _pick_hw_tile(hw, c_total, c_in, n_branch, lane_w, c_out,
                  budget_bytes=_TILE_VMEM_BUDGET):
    """Stage-2b tile along H*W: full dim if small, else a mult-of-128 tile that
    keeps (out + x + kup) x2 + yn x2 under the budget."""
    bytes_per = 4
    fixed = 2 * n_branch * c_out * lane_w * bytes_per     # yn block, x2
    per_col = 2 * bytes_per * (c_total + c_in + n_branch * lane_w)
    avail = max(budget_bytes - fixed, per_col * 128)
    t = min(avail // per_col, hw)
    if t >= hw:
        return hw                                     # full dim is always legal
    return max((t // 128) * 128, 128)


# ----------------------------------------------------------------------------
# Wrapper (NCHW in / NCHW out, like the PyTorch module)
# ----------------------------------------------------------------------------
def pyramid_pooling_module(x, params, pool_sizes):
    N, C_in, H, W = (int(d) for d in x.shape)
    HW = H * W
    B = len(pool_sizes)
    C_out = int(params[0][0].shape[0])
    C_tot = C_in + B * C_out

    s2 = [int(s) * int(s) for s in pool_sizes]
    off = np.concatenate([[0], np.cumsum(s2)]).astype(int)   # packed col offsets
    LW = max(128, _cdiv(int(off[-1]), 128) * 128)            # packed lane width

    # ---- host-side glue: packed pooling / upsample operators, BN mask with
    #      1/(N*s^2) folded in ------------------------------------------------
    kpool = np.zeros((HW, LW), np.float32)
    kup = np.zeros((B, LW, HW), np.float32)
    msk = np.zeros((B, 1, N * LW), np.float32)
    for b, s in enumerate(pool_sizes):
        ph = _adaptive_pool_matrix(s, H)
        pw = _adaptive_pool_matrix(s, W)
        ah = _bilinear_matrix(H, s)
        aw = _bilinear_matrix(W, s)
        o0, o1 = int(off[b]), int(off[b + 1])
        kpool[:, o0:o1] = np.kron(ph, pw).T        # (HW, s^2) at packed offset
        kup[b, o0:o1, :] = np.kron(ah, aw).T       # (s^2, HW) at packed offset
        for n in range(N):
            msk[b, 0, n * LW + o0: n * LW + o1] = 1.0 / (N * s * s)
    kpool = jnp.asarray(kpool)
    kup = jnp.asarray(kup)
    msk = jnp.asarray(msk)

    w_stack = jnp.stack([w for (w, _, _) in params])                 # (B,Cout,Cin)
    gamma = jnp.stack([g.reshape(-1, 1) for (_, g, _) in params])    # (B,Cout,1)
    beta = jnp.stack([bb.reshape(-1, 1) for (_, _, bb) in params])   # (B,Cout,1)

    x3 = x.reshape(N, C_in, HW)

    # ---- stage 1: fused, packed adaptive average pooling --------------------
    # pooled[(c), n*LW + off_b + p] = <x[n, c, :], pool weights of branch b, p>
    # Written directly in a channels-on-sublanes layout (Cin, N*LW) via the
    # out_spec index map -> no transpose anywhere downstream.
    TC = _pick_channel_tile(C_in, HW, LW)
    n_ct = _cdiv(C_in, TC)

    def pool_kernel(x_ref, kpool_ref, pooled_ref):
        # x_ref: (1, TC, HW); kpool_ref: (HW, LW); pooled_ref: (TC, LW)
        pooled_ref[...] = jnp.dot(x_ref[0], kpool_ref[...],
                                  preferred_element_type=jnp.float32)

    pooled = pl.pallas_call(
        pool_kernel,
        out_shape=jax.ShapeDtypeStruct((C_in, N * LW), jnp.float32),
        grid=(N, n_ct),
        in_specs=[
            pl.BlockSpec((1, TC, HW), lambda n, c: (n, c, 0)),
            # NOTE: grid-invariant; pl.Buffered(1) would halve its VMEM cost on
            # v7x, left at default double-buffering for compile portability.
            pl.BlockSpec((HW, LW), lambda n, c: (0, 0)),
        ],
        out_specs=pl.BlockSpec((TC, LW), lambda n, c: (c, n)),
        compiler_params=pltpu.CompilerParams(
            dimension_semantics=("parallel", "parallel"),
            vmem_limit_bytes=_VMEM_LIMIT),
    )(x3, kpool)

    # ---- stage 2a: 1x1 conv + BatchNorm + ReLU, ONCE per branch -------------
    def conv_bn_kernel(pooled_ref, w_ref, gamma_ref, beta_ref, msk_ref, yn_ref):
        # pooled_ref: (Cin, N*LW); w_ref: (1, Cout, Cin); gamma/beta: (1, Cout, 1)
        # msk_ref: (1, 1, N*LW) with 1/(N*s^2) on this branch's packed columns
        # yn_ref: (1, Cout, N*LW)
        y = jnp.dot(w_ref[0], pooled_ref[...],
                    preferred_element_type=jnp.float32)        # (Cout, N*LW)
        m = msk_ref[0]                                         # (1, N*LW)
        # BN batch stats (biased variance, eps=1e-5); both sums are masked
        # because off-branch packed columns hold other branches' values.
        mean = jnp.sum(y * m, axis=1, keepdims=True)           # (Cout, 1)
        cen = y - mean
        var = jnp.sum(cen * cen * m, axis=1, keepdims=True)    # (Cout, 1)
        yn = cen * jax.lax.rsqrt(var + 1e-5) * gamma_ref[0] + beta_ref[0]
        yn_ref[0] = jnp.maximum(yn, 0.0)                       # ReLU

    y_norm = pl.pallas_call(
        conv_bn_kernel,
        out_shape=jax.ShapeDtypeStruct((B, C_out, N * LW), jnp.float32),
        grid=(B,),
        in_specs=[
            pl.BlockSpec((C_in, N * LW), lambda b: (0, 0)),      # grid-invariant
            pl.BlockSpec((1, C_out, C_in), lambda b: (b, 0, 0)),
            pl.BlockSpec((1, C_out, 1), lambda b: (b, 0, 0)),
            pl.BlockSpec((1, C_out, 1), lambda b: (b, 0, 0)),
            pl.BlockSpec((1, 1, N * LW), lambda b: (b, 0, 0)),
        ],
        out_specs=pl.BlockSpec((1, C_out, N * LW), lambda b: (b, 0, 0)),
        compiler_params=pltpu.CompilerParams(
            dimension_semantics=("parallel",),
            vmem_limit_bytes=_VMEM_LIMIT),
    )(pooled, w_stack, gamma, beta, msk)

    # ---- stage 2b: bilinear upsample + assemble full output (no concat) -----
    THW = _pick_hw_tile(HW, C_tot, C_in, B, LW, C_out)
    n_hw = _cdiv(HW, THW)

    def upsample_concat_kernel(yn_ref, x_ref, kup_ref, out_ref):
        # yn_ref: (B, Cout, LW) for this sample; x_ref: (1, Cin, THW)
        # kup_ref: (B, LW, THW); out_ref: (1, Cin + B*Cout, THW)
        out_ref[0, 0:C_in, :] = x_ref[0].astype(out_ref.dtype)   # x pass-through
        for b in range(B):
            c0 = C_in + b * C_out
            if pool_sizes[b] == 1:
                # s=1 fast path: bilinear upsample of a 1x1 map is a constant.
                col = yn_ref[b][:, int(off[b]):int(off[b]) + 1]   # (Cout, 1)
                ub = jnp.broadcast_to(col, (C_out, THW))
            else:
                # kup rows outside branch b's packed range are zero, so garbage
                # (off-branch) lanes of yn never reach the output.
                ub = jnp.dot(yn_ref[b], kup_ref[b],
                             preferred_element_type=jnp.float32)  # (Cout, THW)
            out_ref[0, c0:c0 + C_out, :] = ub.astype(out_ref.dtype)

    out = pl.pallas_call(
        upsample_concat_kernel,
        out_shape=jax.ShapeDtypeStruct((N, C_tot, HW), x.dtype),
        grid=(N, n_hw),
        in_specs=[
            pl.BlockSpec((B, C_out, LW), lambda n, t: (0, 0, n)),
            pl.BlockSpec((1, C_in, THW), lambda n, t: (n, 0, t)),
            pl.BlockSpec((B, LW, THW), lambda n, t: (0, 0, t)),
        ],
        out_specs=pl.BlockSpec((1, C_tot, THW), lambda n, t: (n, 0, t)),
        compiler_params=pltpu.CompilerParams(
            dimension_semantics=("parallel", "parallel"),
            vmem_limit_bytes=_VMEM_LIMIT),
    )(y_norm, x3, kup)

    return out.reshape(N, C_tot, H, W)


# ----------------------------------------------------------------------------
# Deterministic parameter init (shapes from the module's __init__)
# ----------------------------------------------------------------------------
def make_params(key, in_channels, out_channels, pool_sizes):
    params = []
    for _ in pool_sizes:
        key, sub = jax.random.split(key)
        # Conv2d(in, out, kernel_size=1, bias=False) weight -> (out, in)
        w = jax.random.normal(sub, (out_channels, in_channels), jnp.float32) * (
            1.0 / np.sqrt(in_channels))
        gamma = jnp.ones((out_channels,), jnp.float32)   # BN weight
        beta = jnp.zeros((out_channels,), jnp.float32)   # BN bias
        params.append((w, gamma, beta))
    return params


# ----------------------------------------------------------------------------
# Pure-JAX reference (same math, no Pallas) for a numerical sanity check
# ----------------------------------------------------------------------------
def _reference(x, params, pool_sizes):
    outs = [x]
    _, _, H, W = x.shape
    for (w, gamma, beta), s in zip(params, pool_sizes):
        ph = jnp.asarray(_adaptive_pool_matrix(s, H))
        pw = jnp.asarray(_adaptive_pool_matrix(s, W))
        ah = jnp.asarray(_bilinear_matrix(H, s))
        aw = jnp.asarray(_bilinear_matrix(W, s))
        pooled = jnp.einsum('ih,jw,nchw->ncij', ph, pw, x)
        y = jnp.einsum('oc,ncij->noij', w, pooled)
        mean = y.mean(axis=(0, 2, 3), keepdims=True)
        var = ((y - mean) ** 2).mean(axis=(0, 2, 3), keepdims=True)
        y = (y - mean) * jax.lax.rsqrt(var + 1e-5)
        y = y * gamma.reshape(1, -1, 1, 1) + beta.reshape(1, -1, 1, 1)
        y = jnp.maximum(y, 0.0)
        outs.append(jnp.einsum('hi,wj,noij->nohw', ah, aw, y))
    return jnp.concatenate(outs, axis=1)


if __name__ == "__main__":
    key = jax.random.PRNGKey(0)
    key, xk = jax.random.split(key)

    in_channels, out_channels = 4, 2
    pool_sizes = (1, 2, 3, 6)
    x = jax.random.normal(xk, (2, in_channels, 16, 16), jnp.float32)

    params = make_params(key, in_channels, out_channels, pool_sizes)

    out = pyramid_pooling_module(x, params, pool_sizes)
    out = jax.block_until_ready(out)

    assert out.shape == (2, in_channels + out_channels * len(pool_sizes), 16, 16)
    ref = _reference(x, params, pool_sizes)
    np.testing.assert_allclose(np.asarray(out), np.asarray(ref),
                               atol=1e-4, rtol=1e-4)
    print("KERNEL_OK")
</pallas_src>

<mosaic_0001>
module attributes {stable_mosaic.version = 11 : i64} {
  func.func @pool_kernel(%arg0: i32, %arg1: i32, %arg2: memref<1x4x256xf32, #tpu.memory_space<vmem>>, %arg3: memref<256x128xf32, #tpu.memory_space<vmem>>, %arg4: memref<4x128xf32, #tpu.memory_space<vmem>>) attributes {dimension_semantics = [#tpu.dimension_semantics<parallel>, #tpu.dimension_semantics<parallel>], iteration_bounds = array<i64: 2, 1>, scalar_prefetch = 0 : i64, scratch_operands = 0 : i64, tpu.core_type = #tpu.core_type<tc>, window_params = [{transform_indices = @transform_0, window_bounds = array<i64: 1, 4, 256>}, {pipeline_mode = #tpu.pipeline_mode<synchronous>, transform_indices = @transform_1, window_bounds = array<i64: 256, 128>}, {transform_indices = @transform_2, window_bounds = array<i64: 4, 128>}]} {
    %c0 = arith.constant 0 : index
    %c0_0 = arith.constant 0 : index
    %c0_1 = arith.constant 0 : index
    %0 = vector.load %arg2[%c0, %c0_0, %c0_1] : memref<1x4x256xf32, #tpu.memory_space<vmem>>, vector<1x4x256xf32>
    %1 = vector.shape_cast %0 : vector<1x4x256xf32> to vector<4x256xf32>
    %c0_2 = arith.constant 0 : index
    %c0_3 = arith.constant 0 : index
    %2 = vector.load %arg3[%c0_2, %c0_3] : memref<256x128xf32, #tpu.memory_space<vmem>>, vector<256x128xf32>
    %cst = arith.constant dense<0.000000e+00> : vector<4x128xf32>
    %3 = tpu.matmul %1, %2, %cst {dimension_numbers = #tpu.dot_dimension_numbers<[1], [0], [0], [1], [0, 0, 1, 1], [], []>} : vector<4x256xf32>, vector<256x128xf32>, vector<4x128xf32> -> vector<4x128xf32>
    %c0_4 = arith.constant 0 : index
    %c0_5 = arith.constant 0 : index
    %4 = vector.load %arg4[%c0_4, %c0_5] : memref<4x128xf32, #tpu.memory_space<vmem>>, vector<4x128xf32>
    tpu.vector_store %arg4[%c0_4, %c0_5], %3 {strides = array<i32>} : memref<4x128xf32, #tpu.memory_space<vmem>>, vector<4x128xf32>,
    return
  }
  func.func @transform_0(%arg0: i32, %arg1: i32) -> (i32, i32, i32) {
    %c0_i32 = arith.constant 0 : i32
    %c0_i32_0 = arith.constant 0 : i32
    return %arg0, %arg1, %c0_i32 : i32, i32, i32
  }
  func.func @transform_1(%arg0: i32, %arg1: i32) -> (i32, i32) {
    %c0_i32 = arith.constant 0 : i32
    %c0_i32_0 = arith.constant 0 : i32
    %c0_i32_1 = arith.constant 0 : i32
    return %c0_i32, %c0_i32_0 : i32, i32
  }
  func.func @transform_2(%arg0: i32, %arg1: i32) -> (i32, i32) {
    %c0_i32 = arith.constant 0 : i32
    return %arg1, %arg0 : i32, i32
  }
}

</mosaic_0001>

<llo_original>
// kernel: tpu_custom_call.1
$region0: #{tpu_custom_call.1}
  #allocation0 [shape = 'u32[]', space=smem, size = 0x4, offset = 0x4, fixed_abs, tag = 'smem constant byte address 0x4 - core index']
  #allocation1 [shape = 'u32[144,128]{1,0:T(1,128)}', space=vmem, size = 0x12000, scoped, tag = 'internal scratch']
  %s0 = inlined_call_operand.hbm [shape: f32[2,4,256], index: 0, kind: input, shape index: {}]
  %s1 = inlined_call_operand.hbm [shape: f32[256,128], index: 1, kind: input, shape index: {}]
  %s2 = inlined_call_operand.hbm [shape: f32[4,256], index: 2, kind: output, shape index: {}]
  %s3 = sld [smem:[#allocation0]]
  $region49: #{tpu_custom_call.1} parent=0
    _
  %s5 = ssub.s32 1, %s3
  %s6 = scalar_select 0, %s5, %s3
  $region1: #{tpu_custom_call.1} parent=0
    #allocation2 [shape = 'u8[8192]{0}', space=vmem, size = 0x2000, scoped, tag = 'input window, operand 0']
    #allocation3 [shape = 's32[2]{0}', space=sflag, size = 0x8, scoped, tag = 'scoped memory for tpu_custom_call.1']
    #allocation4 [shape = 's32[2]{0}', space=sflag, size = 0x8, scoped, tag = 'scoped memory for tpu_custom_call.1']
    #allocation5 [shape = 'u8[131072]{0}', space=vmem, size = 0x20000, scoped, tag = 'input window, operand 1, single buffered']
    #allocation6 [shape = 's32[1]{0}', space=sflag, size = 0x4, scoped, tag = 'scoped memory for tpu_custom_call.1']
    #allocation7 [shape = 'u8[4096]{0}', space=vmem, size = 0x1000, scoped, tag = 'output window, operand 0']
    %7 = vsyncpa [#allocation3], 0
    %s8 = scalar_lea.sflag [#allocation3], 1
    %9 = vsyncpa %s8, 0
    %10 = vsyncpa [#allocation6], 0
    %11 = vsyncpa [#allocation4], 0
    %s12 = scalar_lea.sflag [#allocation4], 1
    %13 = vsyncpa %s12, 0
    loop: start=0, step=1, limit=4
    $region2: #{tpu_custom_call.1} parent=1 // loop_pre_header
      _
    $region3: #{tpu_custom_call.1} parent=1 // loop_header
      %s15 = sphi 0, %s19
      %p16 = scmp.ge.s32.totalorder %s15, 4
      %s22 = sphi 0, %s34
      %s23 = sphi 0, %s30
      %s24 = sphi 0, %s22
      %s25 = sphi 0, %s23
      %s26 = sphi 0, %s24
      %s27 = sphi 0, %s25
      %s39 = sphi 0, %s41
      %s42 = sphi 0, %s39
      %s43 = sphi 0, %s42
      %s59 = sphi 0, %s43
      %s63 = sphi 0, %s63
      %s65 = sphi 0, %s63
      %s66 = sphi 0, %s65
      %s80 = sphi 0, %s66
      %s88 = sphi 0, %s90
      %s91 = sphi 0, %s88
      %s92 = sphi 0, %s91
      %s108 = sphi 0, %s92
    $region4: #{tpu_custom_call.1} parent=1 // loop_header_branch
      %18 = sbr.rel (%p16) target = $region8
    $region5: #{tpu_custom_call.1} parent=1 // loop_body
      %s20 = ssub.s32 %s15, 1
      %s21 = ssub.s32 %s15, 2
      %s28 = sadd.s32 1, %s23
      %p29 = scmp.ge.s32.totalorder %s28, 1
      %s30 = scalar_select %p29, 0, %s28
      %s31 = sadd.s32 1, %s22
      %s32 = scalar_select %p29, %s31, %s22
      %p33 = scmp.ge.s32.totalorder %s32, 2
      %s34 = scalar_select %p33, 0, %s32
      %s35 = ssub.s32 %s22, %s34
      %s36 = ssub.s32 %s23, %s30
      %s37 = sor.u32 %s35, %s36
      %p38 = scmp.eq.s32.totalorder %s37, 0
      %s40 = sadd.s32 %s39, 1
      %s41 = scalar_select %p38, %s39, %s40
      %p44 = pneg %p38
      %p45 = scmp.eq.s32.totalorder %s15, 1
      %p46 = por %p44, %p45
      %p47 = scmp.ne.s32.totalorder %s39, %s42
      %p48 = scmp.eq.s32.totalorder %s15, 0
      %p49 = por %p47, %p48
      %p50 = scmp.ne.s32.totalorder %s39, %s42
      %p51 = scmp.eq.s32.totalorder %s20, 1
      %p52 = por %p50, %p51
      %p53 = scmp.ne.s32.totalorder %s42, %s43
      %p54 = scmp.eq.s32.totalorder %s20, 0
      %p55 = por %p53, %p54
      %p56 = scmp.ne.s32.totalorder %s42, %s43
      %p57 = scmp.eq.s32.totalorder %s21, 1
      %p58 = por %p56, %p57
      %p60 = scmp.ne.s32.totalorder %s43, %s59
      %p61 = scmp.eq.s32.totalorder %s21, 0
      %p62 = por %p60, %p61
      %s64 = sadd.s32 %s63, 1
      %p67 = scmp.eq.s32.totalorder %s15, 1
      %p68 = scmp.ne.s32.totalorder %s63, %s65
      %p69 = scmp.eq.s32.totalorder %s15, 0
      %p70 = por %p68, %p69
      %p71 = scmp.ne.s32.totalorder %s63, %s65
      %p72 = scmp.eq.s32.totalorder %s20, 1
      %p73 = por %p71, %p72
      %p74 = scmp.ne.s32.totalorder %s65, %s66
      %p75 = scmp.eq.s32.totalorder %s20, 0
      %p76 = por %p74, %p75
      %p77 = scmp.ne.s32.totalorder %s65, %s66
      %p78 = scmp.eq.s32.totalorder %s21, 1
      %p79 = por %p77, %p78
      %p81 = scmp.ne.s32.totalorder %s66, %s80
      %p82 = scmp.eq.s32.totalorder %s21, 0
      %p83 = por %p81, %p82
      %s84 = ssub.s32 %s23, %s30
      %s85 = ssub.s32 %s22, %s34
      %s86 = sor.u32 %s84, %s85
      %p87 = scmp.eq.s32.totalorder %s86, 0
      %s89 = sadd.s32 %s88, 1
      %s90 = scalar_select %p87, %s88, %s89
      %p93 = pneg %p87
      %p94 = scmp.eq.s32.totalorder %s15, 1
      %p95 = por %p93, %p94
      %p96 = scmp.ne.s32.totalorder %s88, %s91
      %p97 = scmp.eq.s32.totalorder %s15, 0
      %p98 = por %p96, %p97
      %p99 = scmp.ne.s32.totalorder %s88, %s91
      %p100 = scmp.eq.s32.totalorder %s20, 1
      %p101 = por %p99, %p100
      %p102 = scmp.ne.s32.totalorder %s91, %s92
      %p103 = scmp.eq.s32.totalorder %s20, 0
      %p104 = por %p102, %p103
      %p105 = scmp.ne.s32.totalorder %s91, %s92
      %p106 = scmp.eq.s32.totalorder %s21, 1
      %p107 = por %p105, %p106
      %p109 = scmp.ne.s32.totalorder %s92, %s108
      %p110 = scmp.eq.s32.totalorder %s21, 0
      %p111 = por %p109, %p110
      %p112 = scmp.le.s32.totalorder 1, %s15
      %p113 = scmp.lt.s32.totalorder %s15, 3
      %p114 = pnand %p112, %p113
      %p115 = pneg %p114
      // Predicated region
      $region9: #{tpu_custom_call.1} parent=5 // pred_check
        _
      $region10: #{tpu_custom_call.1} parent=5 // pred_check_branch
        %117 = sbr.rel (%p114) target = $region12
      $region11: #{tpu_custom_call.1} parent=5 // pred_region
        %s118 = ssub.s32 %s15, 1
        // Predicated region
        $region13: #{tpu_custom_call.1} parent=11 // pred_check
          %p119 = pneg %p76
        $region14: #{tpu_custom_call.1} parent=11 // pred_check_branch
          %121 = sbr.rel (%p119) target = $region16
        $region15: #{tpu_custom_call.1} parent=11 // pred_region
          %s123 = ssub.s32 4096, 4096
          %124 = vsyncadd [#allocation6], %s123
          %s125 = sshll.u32 [#allocation5], 4
          %s126 = int_to_ptr.vmem [resolvable:$true] %s125
          %131 = dma.hbm_to_vmem [thread:$0]  %s1, 4096, %s126, [#allocation6], 128, 128, 8
        $region16: #{tpu_custom_call.1} parent=11 // pred_fallthru
          _
      $region12: #{tpu_custom_call.1} parent=5 // pred_fallthru
        _
      %p132 = scmp.lt.s32.totalorder %s15, 2
      // Predicated region
      $region17: #{tpu_custom_call.1} parent=5 // pred_check
        %p133 = pneg %p132
      $region18: #{tpu_custom_call.1} parent=5 // pred_check_branch
        %135 = sbr.rel (%p133) target = $region20
      $region19: #{tpu_custom_call.1} parent=5 // pred_region
        // Predicated region
        $region21: #{tpu_custom_call.1} parent=19 // pred_check
          %p136 = pneg %p49
        $region22: #{tpu_custom_call.1} parent=19 // pred_check_branch
          %138 = sbr.rel (%p136) target = $region24
        $region23: #{tpu_custom_call.1} parent=19 // pred_region
          %s139 = sand.u32 %s39, 1
          %s140 = scalar_lea.sflag [#allocation3], %s139
          %s141 = sand.u32 %s39, 1
          %s142 = smul.addr %s141, 8
          %s143 = scalar_lea.vmem [#allocation2], %s142
          %s145 = ssub.s32 128, 128
          %146 = vsyncadd %s140, %s145
          %s147 = smul.addr %s23, 2
          %s148 = smul.addr %s22, 2
          %s149 = sadd.s32 %s147, %s148
          %s150 = smul.addr %s149, 64
          %s151 = scalar_lea.hbm %s0, %s150
          %s153 = sshll.u32 %s143, 4
          %s154 = int_to_ptr.vmem [resolvable:$true] %s153
          %156 = dma.hbm_to_vmem [thread:$0]  %s151, 128, %s154, %s140
        $region24: #{tpu_custom_call.1} parent=19 // pred_fallthru
          _
      $region20: #{tpu_custom_call.1} parent=5 // pred_fallthru
        _
      %p157 = scmp.le.s32.totalorder 1, %s15
      %p158 = scmp.lt.s32.totalorder %s15, 3
      %p159 = pnand %p157, %p158
      %p160 = pneg %p159
      // Predicated region
      $region25: #{tpu_custom_call.1} parent=5 // pred_check
        _
      $region26: #{tpu_custom_call.1} parent=5 // pred_check_branch
        %162 = sbr.rel (%p159) target = $region28
      $region27: #{tpu_custom_call.1} parent=5 // pred_region
        %s163 = ssub.s32 %s15, 1
        %s164 = sand.u32 %s42, 1
        %s165 = scalar_lea.sflag [#allocation3], %s164
        %s166 = sand.u32 %s42, 1
        %s167 = smul.addr %s166, 8
        %s168 = scalar_lea.vmem [#allocation2], %s167
        // Predicated region
        $region29: #{tpu_custom_call.1} parent=27 // pred_check
          %p169 = pneg %p55
        $region30: #{tpu_custom_call.1} parent=27 // pred_check_branch
          %171 = sbr.rel (%p169) target = $region32
        $region31: #{tpu_custom_call.1} parent=27 // pred_region
          %172 = dma.done %s165, 128
        $region32: #{tpu_custom_call.1} parent=27 // pred_fallthru
          _
        // Predicated region
        $region33: #{tpu_custom_call.1} parent=27 // pred_check
          %p173 = pneg %p76
        $region34: #{tpu_custom_call.1} parent=27 // pred_check_branch
          %175 = sbr.rel (%p173) target = $region36
        $region35: #{tpu_custom_call.1} parent=27 // pred_region
          %176 = dma.done [#allocation6], 4096
        $region36: #{tpu_custom_call.1} parent=27 // pred_fallthru
          _
        %s177 = sand.u32 %s42, 1
        %s178 = scalar_lea.sflag [#allocation3], %s177
        %s179 = sand.u32 %s42, 1
        %s180 = smul.addr %s179, 8
        %s181 = scalar_lea.vmem [#allocation2], %s180
        %p182 = pneg %p55
        %p183 = pneg %p52
        %p184 = pneg %p76
        %p185 = pneg %p73
        %p186 = pneg %p104
        %p187 = pneg %p101
        %s188 = sand.u32 %s91, 1
        %s189 = scalar_lea.sflag [#allocation4], %s188
        %s190 = sand.u32 %s91, 1
        %s191 = smul.addr %s190, 4
        %s192 = scalar_lea.vmem [#allocation7], %s191
        %v193 = vld [vmem:[%s168] sm:$0xff]
        %v194 = vld [vmem:[#allocation5] sm:$0xff]
        %v195 = vld [vmem:[#allocation5 + $0x8] sm:$0xff]
        %v196 = vld [vmem:[#allocation5 + $0x10] sm:$0xff]
        %v197 = vld [vmem:[#allocation5 + $0x18] sm:$0xff]
        %v198 = vld [vmem:[#allocation5 + $0x20] sm:$0xff]
        %v199 = vld [vmem:[#allocation5 + $0x28] sm:$0xff]
        %v200 = vld [vmem:[#allocation5 + $0x30] sm:$0xff]
        %v201 = vld [vmem:[#allocation5 + $0x38] sm:$0xff]
        %v202 = vld [vmem:[#allocation5 + $0x40] sm:$0xff]
        %v203 = vld [vmem:[#allocation5 + $0x48] sm:$0xff]
        %v204 = vld [vmem:[#allocation5 + $0x50] sm:$0xff]
        %v205 = vld [vmem:[#allocation5 + $0x58] sm:$0xff]
        %v206 = vld [vmem:[#allocation5 + $0x60] sm:$0xff]
        %v207 = vld [vmem:[#allocation5 + $0x68] sm:$0xff]
        %v208 = vld [vmem:[#allocation5 + $0x70] sm:$0xff]
        %v209 = vld [vmem:[#allocation5 + $0x78] sm:$0xff]
        %v210 = vld [vmem:[#allocation5 + $0x80] sm:$0xff]
        %v211 = vld [vmem:[#allocation5 + $0x88] sm:$0xff]
        %v212 = vld [vmem:[#allocation5 + $0x90] sm:$0xff]
        %v213 = vld [vmem:[#allocation5 + $0x98] sm:$0xff]
        %v214 = vld [vmem:[#allocation5 + $0xa0] sm:$0xff]
        %v215 = vld [vmem:[#allocation5 + $0xa8] sm:$0xff]
        %v216 = vld [vmem:[#allocation5 + $0xb0] sm:$0xff]
        %v217 = vld [vmem:[#allocation5 + $0xb8] sm:$0xff]
        %v218 = vld [vmem:[#allocation5 + $0xc0] sm:$0xff]
        %v219 = vld [vmem:[#allocation5 + $0xc8] sm:$0xff]
        %v220 = vld [vmem:[#allocation5 + $0xd0] sm:$0xff]
        %v221 = vld [vmem:[#allocation5 + $0xd8] sm:$0xff]
        %v222 = vld [vmem:[#allocation5 + $0xe0] sm:$0xff]
        %v223 = vld [vmem:[#allocation5 + $0xe8] sm:$0xff]
        %v224 = vld [vmem:[#allocation5 + $0xf0] sm:$0xff]
        %v225 = vld [vmem:[#allocation5 + $0xf8] sm:$0xff]
        %v227 = vcombine.high %v193, %v193
        %229 = vmatprep.subr.mxu0 0.0
        %230 = vmatpush1.msra.mxu0 %v209
        %231 = vmatprep.subr.mxu0 0.0
        %232 = vmatpush1.msra.mxu0 %v208
        %233 = vmatprep.subr.mxu0 0.0
        %234 = vmatpush1.msra.mxu0 %v207
        %235 = vmatprep.subr.mxu0 0.0
        %236 = vmatpush1.msra.mxu0 %v206
        %237 = vmatprep.subr.mxu0 0.0
        %238 = vmatpush1.msra.mxu0 %v205
        %239 = vmatprep.subr.mxu0 0.0
        %240 = vmatpush1.msra.mxu0 %v204
        %241 = vmatprep.subr.mxu0 0.0
        %242 = vmatpush1.msra.mxu0 %v203
        %243 = vmatprep.subr.mxu0 0.0
        %244 = vmatpush1.msra.mxu0 %v202
        %245 = vmatprep.subr.mxu0 0.0
        %246 = vmatpush1.msra.mxu0 %v201
        %247 = vmatprep.subr.mxu0 0.0
        %248 = vmatpush1.msra.mxu0 %v200
        %249 = vmatprep.subr.mxu0 0.0
        %250 = vmatpush1.msra.mxu0 %v199
        %251 = vmatprep.subr.mxu0 0.0
        %252 = vmatpush1.msra.mxu0 %v198
        %253 = vmatprep.subr.mxu0 0.0
        %254 = vmatpush1.msra.mxu0 %v197
        %255 = vmatprep.subr.mxu0 0.0
        %256 = vmatpush1.msra.mxu0 %v196
        %257 = vmatprep.subr.mxu0 0.0
        %258 = vmatpush1.msra.mxu0 %v195
        %259 = vmatprep.subr.mxu0 0.0
        %260 = vmatpush1.msra.mxu0 %v194
        %261 = vmatprep.subr.mxu0 0.0
        %262 = vmatpush2.msra.mxu0 %v225
        %263 = vmatprep.subr.mxu0 0.0
        %264 = vmatpush2.msra.mxu0 %v224
        %265 = vmatprep.subr.mxu0 0.0
        %266 = vmatpush2.msra.mxu0 %v223
        %267 = vmatprep.subr.mxu0 0.0
        %268 = vmatpush2.msra.mxu0 %v222
        %269 = vmatprep.subr.mxu0 0.0
        %270 = vmatpush2.msra.mxu0 %v221
        %271 = vmatprep.subr.mxu0 0.0
        %272 = vmatpush2.msra.mxu0 %v220
        %273 = vmatprep.subr.mxu0 0.0
        %274 = vmatpush2.msra.mxu0 %v219
        %275 = vmatprep.subr.mxu0 0.0
        %276 = vmatpush2.msra.mxu0 %v218
        %277 = vmatprep.subr.mxu0 0.0
        %278 = vmatpush2.msra.mxu0 %v217
        %279 = vmatprep.subr.mxu0 0.0
        %280 = vmatpush2.msra.mxu0 %v216
        %281 = vmatprep.subr.mxu0 0.0
        %282 = vmatpush2.msra.mxu0 %v215
        %283 = vmatprep.subr.mxu0 0.0
        %284 = vmatpush2.msra.mxu0 %v214
        %285 = vmatprep.subr.mxu0 0.0
        %286 = vmatpush2.msra.mxu0 %v213
        %287 = vmatprep.subr.mxu0 0.0
        %288 = vmatpush2.msra.mxu0 %v212
        %289 = vmatprep.subr.mxu0 0.0
        %290 = vmatpush2.msra.mxu0 %v211
        %291 = vmatprep.subr.mxu0 0.0
        %292 = vmatpush2.msra.mxu0 %v210
        %293 = vmatprep.mubr.f32.mxu0 %v227
        %294 = vmatmul.mubr.f32.gmra.mxu0 %v193
        %v295 = vpop.f32.mrf.mxu0
        %v296 = vadd.f32 0.0, %v295
        %v297 = vpop.f32.mrf.mxu0
        %298 = vdwg.mxu0
        %299 = vst [vmem:[%s192] sm:$0xf] %v296
        %s300 = sand.u32 %s91, 1
        %s301 = scalar_lea.sflag [#allocation4], %s300
        %s302 = sand.u32 %s91, 1
        %s303 = smul.addr %s302, 4
        %s304 = scalar_lea.vmem [#allocation7], %s303
        // Predicated region
        $region37: #{tpu_custom_call.1} parent=27 // pred_check
          %p305 = pneg %p101
        $region38: #{tpu_custom_call.1} parent=27 // pred_check_branch
          %307 = sbr.rel (%p305) target = $region40
        $region39: #{tpu_custom_call.1} parent=27 // pred_region
          %s309 = ssub.s32 64, 64
          %310 = vsyncadd %s301, %s309
          %s311 = smul.addr %s25, 2
          %s312 = sadd.s32 %s24, %s311
          %s313 = smul.addr %s312, 64
          %s314 = scalar_lea.hbm %s2, %s313
          %s316 = sshll.u32 %s304, 4
          %s317 = int_to_ptr.vmem [resolvable:$true] %s316
          %319 = dma.vmem_to_hbm [thread:$0]  %s317, 64, %s314, %s301
        $region40: #{tpu_custom_call.1} parent=27 // pred_fallthru
          _
      $region28: #{tpu_custom_call.1} parent=5 // pred_fallthru
        _
      %p320 = scmp.le.s32.totalorder 2, %s15
      // Predicated region
      $region41: #{tpu_custom_call.1} parent=5 // pred_check
        %p321 = pneg %p320
      $region42: #{tpu_custom_call.1} parent=5 // pred_check_branch
        %323 = sbr.rel (%p321) target = $region44
      $region43: #{tpu_custom_call.1} parent=5 // pred_region
        %s324 = ssub.s32 %s15, 2
        // Predicated region
        $region45: #{tpu_custom_call.1} parent=43 // pred_check
          %p325 = pneg %p107
        $region46: #{tpu_custom_call.1} parent=43 // pred_check_branch
          %327 = sbr.rel (%p325) target = $region48
        $region47: #{tpu_custom_call.1} parent=43 // pred_region
          %s328 = sand.u32 %s92, 1
          %s329 = scalar_lea.sflag [#allocation4], %s328
          %s330 = sand.u32 %s92, 1
          %s331 = smul.addr %s330, 4
          %s332 = scalar_lea.vmem [#allocation7], %s331
          %333 = dma.done %s329, 64
        $region48: #{tpu_custom_call.1} parent=43 // pred_fallthru
          _
      $region44: #{tpu_custom_call.1} parent=5 // pred_fallthru
        _
    $region6: #{tpu_custom_call.1} parent=1 // loop_footer
      %s19 = sadd.s32 1, %s15
    $region7: #{tpu_custom_call.1} parent=1 // loop_footer_branch
      %14 = sbr.rel target = $region3
    $region8: #{tpu_custom_call.1} parent=1 // loop_exit
      _
    %334 = vsyncpa [#allocation3], 1
    %s335 = scalar_lea.sflag [#allocation3], 1
    %336 = vsyncpa %s335, 1
    %337 = vsyncpa [#allocation6], 1
    %338 = vsyncpa [#allocation4], 1
    %s339 = scalar_lea.sflag [#allocation4], 1
    %340 = vsyncpa %s339, 1

</llo_original>
